<compile_context>
chip_gen: v7x
topology: tpu7x:2x2x1
jax: 0.10.0
libtpu: 0.0.40
codegen_flags: <defaults>
</compile_context>

<pallas_src>
import numpy as np
import jax
import jax.numpy as jnp
from jax.experimental import pallas as pl
from jax.experimental.pallas import tpu as pltpu


def _round_up(v, m):
    return ((v + m - 1) // m) * m


def _pick_vmem_limit_bytes():
    """Per-generation VMEM limit: ~96 MiB on v5e/v6e (128 MiB phys), ~44 MiB on v7x."""
    try:
        cap = int(pltpu.get_tpu_info().vmem_capacity_bytes)
    except Exception:
        cap = 64 << 20  # conservative fallback (v7x per-TC size)
    if cap >= (100 << 20):      # v5e / v6e: 128 MiB physical
        return 96 << 20
    return 44 << 20             # v7x: 64 MiB physical per TC


def _make_kernel(P, TP, needs_mask):
    """P: true (unpadded) param count; TP: lane tile; needs_mask is static."""

    def kernel(x_ref, s_ref, o_ref, acc_ref):
        k = pl.program_id(1)
        last = pl.num_programs(1) - 1

        @pl.when(k == 0)
        def _init():
            acc_ref[...] = jnp.zeros_like(acc_ref)

        x = x_ref[...]                              # (1, TP) f32 (zero-padded tail)
        # Upcast scores in-kernel (HBM traffic stays at native width, e.g. bf16).
        s = s_ref[...].astype(jnp.float32)          # (b_blk, TP)
        prod = x * s                                # broadcast over batch rows

        if needs_mask:
            # Mask only on the final tile; every other step is a plain VPU MAC.
            @pl.when(k != last)
            def _plain():
                acc_ref[...] += prod

            @pl.when(k == last)
            def _masked():
                lane = jax.lax.broadcasted_iota(jnp.int32, (1, TP), 1)
                valid = (k * TP + lane) < P
                acc_ref[...] += jnp.where(valid, prod, 0.0)
        else:
            acc_ref[...] += prod

        @pl.when(k == last)
        def _finalize():
            # Single cross-lane reduce + narrow store, once per batch block.
            o_ref[...] = jnp.sum(acc_ref[...], axis=1, keepdims=True)

    return kernel


def natural_gradient_forward(xs, scores, *, tp=None, b_blk=None):
    """xs: list of parameter arrays; scores: (B, P) with P = total #params."""
    flat_xs = jnp.concatenate([jnp.ravel(x) for x in xs]).astype(jnp.float32)
    B, P = scores.shape
    assert flat_xs.shape[0] == P, "scores dim 1 must equal total parameter count"

    itemsize = jnp.dtype(scores.dtype).itemsize
    # Packed-dtype minimum sublane tile: 8 rows (f32), 16 (bf16), 32 (int8/fp8).
    m = 8 * max(1, 4 // itemsize)

    vmem_limit = _pick_vmem_limit_bytes()

    # --- batch blocking (parallel axis) ---
    if b_blk is None:
        if B <= m:
            b_blk = B
        else:
            # Aim for >= 2 batch blocks so the parallel axis can shard across TCs.
            b_blk = min(_round_up((B + 1) // 2, m), 64)
    assert b_blk == B or b_blk % m == 0, (
        f"b_blk must equal B or be a multiple of {m} for dtype {scores.dtype}")
    num_b = (B + b_blk - 1) // b_blk

    # --- parameter tiling (reduction axis, last in grid) ---
    if tp is None:
        target_block_bytes = 8 << 20  # ~8 MiB scores blocks
        tp_target = max(512, target_block_bytes // max(1, b_blk * itemsize))
        # VMEM: 2*b_blk*tp*itemsize (scores dbl-buf) + b_blk*tp*4 (acc) + 2*tp*4 (x dbl-buf)
        usable = int(vmem_limit * 0.80)
        per_lane_bytes = 2 * b_blk * itemsize + b_blk * 4 + 8
        tp_cap = max(128, usable // per_lane_bytes)
        tp = min(tp_target, tp_cap)
    tp = _round_up(min(int(tp), _round_up(P, 128)), 128)
    P_pad = _round_up(P, tp)
    num_k = P_pad // tp
    needs_mask = (P % tp) != 0

    # Tiny flat-params vector: zero-pad (cheap, P elems only) and stream per tile.
    x2 = jnp.pad(flat_xs, (0, P_pad - P)).reshape(1, P_pad)

    x_spec = pl.BlockSpec((1, tp), lambda b, k: (0, k))
    s_spec = pl.BlockSpec((b_blk, tp), lambda b, k: (b, k))
    o_spec = pl.BlockSpec((b_blk, 1), lambda b, k: (b, 0))

    cost = pl.CostEstimate(
        flops=2 * B * P,
        transcendentals=0,
        bytes_accessed=int(B * P * itemsize + P_pad * 4 + B * 4),
    )

    out = pl.pallas_call(
        _make_kernel(P, tp, needs_mask),
        out_shape=jax.ShapeDtypeStruct((B, 1), jnp.float32),
        grid_spec=pltpu.PrefetchScalarGridSpec(
            num_scalar_prefetch=0,
            grid=(num_b, num_k),
            in_specs=[x_spec, s_spec],
            out_specs=o_spec,
            scratch_shapes=[pltpu.VMEM((b_blk, tp), jnp.float32)],
        ),
        compiler_params=pltpu.CompilerParams(
            dimension_semantics=("parallel", "arbitrary"),
            vmem_limit_bytes=vmem_limit,
        ),
        cost_estimate=cost,
    )(x2, scores)
    return out[:, 0]


if __name__ == "__main__":
    # NaturalGradient(param_sizes) holds params of these shapes; forward takes
    # scores of shape (B, sum(prod(param_sizes))).
    param_sizes = [(8, 32), (64,), (4, 4, 16), (40, 50)]  # P = 256+64+256+2000 = 2576
    B = 16
    P = sum(int(np.prod(s)) for s in param_sizes)

    key = jax.random.PRNGKey(0)
    kx, ks = jax.random.split(key)
    xkeys = jax.random.split(kx, len(param_sizes))
    # Module zero-inits params; use deterministic non-zero values (same shapes).
    xs = [jax.random.normal(k, s, dtype=jnp.float32) for k, s in zip(xkeys, param_sizes)]
    scores = jax.random.normal(ks, (B, P), dtype=jnp.float32)

    flat = jnp.concatenate([jnp.ravel(x) for x in xs])
    ref_f32 = jnp.sum(flat[None, :] * scores, axis=1)

    # 1) auto tiling: 2 batch blocks (megacore-splittable), single masked param tile.
    out1 = jax.block_until_ready(natural_gradient_forward(xs, scores))
    assert out1.shape == (B,)
    np.testing.assert_allclose(np.asarray(out1), np.asarray(ref_f32), rtol=1e-4, atol=1e-4)

    # 2) explicit small tiles: 2 batch blocks x 3 param tiles, mask gated to last step.
    out2 = jax.block_until_ready(natural_gradient_forward(xs, scores, tp=1024, b_blk=8))
    np.testing.assert_allclose(np.asarray(out2), np.asarray(ref_f32), rtol=1e-4, atol=1e-4)

    # 3) bf16 scores stay bf16 in HBM; upcast in-kernel, accumulate in f32;
    #    b_blk respects the 16-row packed sublane tile.
    scores_bf16 = scores.astype(jnp.bfloat16)
    ref_bf16 = jnp.sum(flat[None, :] * scores_bf16.astype(jnp.float32), axis=1)
    out3 = jax.block_until_ready(
        natural_gradient_forward(xs, scores_bf16, tp=512, b_blk=16))
    np.testing.assert_allclose(np.asarray(out3), np.asarray(ref_bf16), rtol=1e-3, atol=1e-3)

    # 4) bf16 with fully automatic tiling.
    out4 = jax.block_until_ready(natural_gradient_forward(xs, scores_bf16))
    np.testing.assert_allclose(np.asarray(out4), np.asarray(ref_bf16), rtol=1e-3, atol=1e-3)

    print("KERNEL_OK")
</pallas_src>

<mosaic_0001>
module attributes {stable_mosaic.version = 11 : i64} {
  func.func @kernel(%arg0: i32, %arg1: i32, %arg2: memref<1x2688xf32, #tpu.memory_space<vmem>>, %arg3: memref<8x2688xf32, #tpu.memory_space<vmem>>, %arg4: memref<8x1xf32, #tpu.memory_space<vmem>>, %arg5: memref<8x2688xf32, #tpu.memory_space<vmem>>) attributes {dimension_semantics = [#tpu.dimension_semantics<parallel>, #tpu.dimension_semantics<arbitrary>], iteration_bounds = array<i64: 2, 1>, scalar_prefetch = 0 : i64, scratch_operands = 1 : i64, tpu.core_type = #tpu.core_type<tc>, window_params = [{transform_indices = @transform_0, window_bounds = array<i64: 1, 2688>}, {transform_indices = @transform_1, window_bounds = array<i64: 8, 2688>}, {transform_indices = @transform_2, window_bounds = array<i64: 8, 1>}]} {
    %c0_i32 = arith.constant 0 : i32
    %0 = arith.cmpi eq, %arg1, %c0_i32 : i32
    %1 = arith.extui %0 : i1 to i32
    %c0_i32_0 = arith.constant 0 : i32
    %2 = arith.cmpi ne, %1, %c0_i32_0 : i32
    scf.if %2 {
      %cst = arith.constant 0.000000e+00 : f32
      %16 = vector.broadcast %cst : f32 to vector<8x2688xf32>
      %c0_10 = arith.constant 0 : index
      %c0_11 = arith.constant 0 : index
      %17 = vector.load %arg5[%c0_10, %c0_11] : memref<8x2688xf32, #tpu.memory_space<vmem>>, vector<8x2688xf32>
      tpu.vector_store %arg5[%c0_10, %c0_11], %16 {strides = array<i32>} : memref<8x2688xf32, #tpu.memory_space<vmem>>, vector<8x2688xf32>,
    } else {
    }
    %c0 = arith.constant 0 : index
    %c0_1 = arith.constant 0 : index
    %3 = vector.load %arg2[%c0, %c0_1] : memref<1x2688xf32, #tpu.memory_space<vmem>>, vector<1x2688xf32>
    %c0_2 = arith.constant 0 : index
    %c0_3 = arith.constant 0 : index
    %4 = vector.load %arg3[%c0_2, %c0_3] : memref<8x2688xf32, #tpu.memory_space<vmem>>, vector<8x2688xf32>
    %5 = vector.broadcast %3 : vector<1x2688xf32> to vector<8x2688xf32>
    %6 = arith.mulf %5, %4 : vector<8x2688xf32>
    %c0_i32_4 = arith.constant 0 : i32
    %7 = arith.cmpi ne, %arg1, %c0_i32_4 : i32
    %8 = arith.extui %7 : i1 to i32
    %c0_i32_5 = arith.constant 0 : i32
    %9 = arith.cmpi ne, %8, %c0_i32_5 : i32
    scf.if %9 {
      %c0_10 = arith.constant 0 : index
      %c0_11 = arith.constant 0 : index
      %16 = vector.load %arg5[%c0_10, %c0_11] : memref<8x2688xf32, #tpu.memory_space<vmem>>, vector<8x2688xf32>
      %17 = arith.addf %16, %6 : vector<8x2688xf32>
      %c0_12 = arith.constant 0 : index
      %c0_13 = arith.constant 0 : index
      %18 = vector.load %arg5[%c0_12, %c0_13] : memref<8x2688xf32, #tpu.memory_space<vmem>>, vector<8x2688xf32>
      tpu.vector_store %arg5[%c0_12, %c0_13], %17 {strides = array<i32>} : memref<8x2688xf32, #tpu.memory_space<vmem>>, vector<8x2688xf32>,
    } else {
    }
    %c0_i32_6 = arith.constant 0 : i32
    %10 = arith.cmpi eq, %arg1, %c0_i32_6 : i32
    %11 = arith.extui %10 : i1 to i32
    %c0_i32_7 = arith.constant 0 : i32
    %12 = arith.cmpi ne, %11, %c0_i32_7 : i32
    scf.if %12 {
      %16 = tpu.iota {dimensions = array<i32: 1>} : vector<1x2688xi32>
      %c2688_i32 = arith.constant 2688 : i32
      %17 = arith.muli %arg1, %c2688_i32 : i32
      %18 = vector.broadcast %17 : i32 to vector<1x2688xi32>
      %19 = arith.addi %18, %16 : vector<1x2688xi32>
      %c2576_i32 = arith.constant 2576 : i32
      %20 = vector.broadcast %c2576_i32 : i32 to vector<1x2688xi32>
      %21 = arith.cmpi slt, %19, %20 : vector<1x2688xi32>
      %c0_10 = arith.constant 0 : index
      %c0_11 = arith.constant 0 : index
      %22 = vector.load %arg5[%c0_10, %c0_11] : memref<8x2688xf32, #tpu.memory_space<vmem>>, vector<8x2688xf32>
      %cst = arith.constant 0.000000e+00 : f32
      %23 = vector.shape_cast %21 : vector<1x2688xi1> to vector<1x2688xi1>
      %24 = vector.broadcast %23 : vector<1x2688xi1> to vector<8x2688xi1>
      %25 = vector.broadcast %cst : f32 to vector<8x2688xf32>
      %26 = arith.select %24, %6, %25 : vector<8x2688xi1>, vector<8x2688xf32>
      %27 = arith.addf %22, %26 : vector<8x2688xf32>
      %c0_12 = arith.constant 0 : index
      %c0_13 = arith.constant 0 : index
      %28 = vector.load %arg5[%c0_12, %c0_13] : memref<8x2688xf32, #tpu.memory_space<vmem>>, vector<8x2688xf32>
      tpu.vector_store %arg5[%c0_12, %c0_13], %27 {strides = array<i32>} : memref<8x2688xf32, #tpu.memory_space<vmem>>, vector<8x2688xf32>,
    } else {
    }
    %c0_i32_8 = arith.constant 0 : i32
    %13 = arith.cmpi eq, %arg1, %c0_i32_8 : i32
    %14 = arith.extui %13 : i1 to i32
    %c0_i32_9 = arith.constant 0 : i32
    %15 = arith.cmpi ne, %14, %c0_i32_9 : i32
    scf.if %15 {
      %c0_10 = arith.constant 0 : index
      %c0_11 = arith.constant 0 : index
      %16 = vector.load %arg5[%c0_10, %c0_11] : memref<8x2688xf32, #tpu.memory_space<vmem>>, vector<8x2688xf32>
      %cst = arith.constant dense<0.000000e+00> : vector<8xf32>
      %17 = vector.multi_reduction <add>, %16, %cst [1] : vector<8x2688xf32> to vector<8xf32>
      %18 = vector.shape_cast %17 : vector<8xf32> to vector<8x1xf32>
      %c0_12 = arith.constant 0 : index
      %c0_13 = arith.constant 0 : index
      %19 = vector.load %arg4[%c0_12, %c0_13] : memref<8x1xf32, #tpu.memory_space<vmem>>, vector<8x1xf32>
      tpu.vector_store %arg4[%c0_12, %c0_13], %18 {strides = array<i32>} : memref<8x1xf32, #tpu.memory_space<vmem>>, vector<8x1xf32>,
    } else {
    }
    return
  }
  func.func @transform_0(%arg0: i32, %arg1: i32) -> (i32, i32) {
    %c0_i32 = arith.constant 0 : i32
    %c0_i32_0 = arith.constant 0 : i32
    return %c0_i32, %arg1 : i32, i32
  }
  func.func @transform_1(%arg0: i32, %arg1: i32) -> (i32, i32) {
    %c0_i32 = arith.constant 0 : i32
    return %arg0, %arg1 : i32, i32
  }
  func.func @transform_2(%arg0: i32, %arg1: i32) -> (i32, i32) {
    %c0_i32 = arith.constant 0 : i32
    %c0_i32_0 = arith.constant 0 : i32
    return %arg0, %c0_i32 : i32, i32
  }
}

</mosaic_0001>

<llo_original>
// kernel: tpu_custom_call.1
$region0: #{tpu_custom_call.1}
  #allocation0 [shape = 'u32[]', space=smem, size = 0x4, offset = 0x4, fixed_abs, tag = 'smem constant byte address 0x4 - core index']
  #allocation1 [shape = 'u32[144,128]{1,0:T(1,128)}', space=vmem, size = 0x12000, scoped, tag = 'internal scratch']
  #allocation2 [shape = 'f32[8,2688]{1,0:T(8,128)}', space=vmem, size = 0x15000, scoped, tag = 'scratch operand']
  %s0 = inlined_call_operand.hbm [shape: f32[1,2688], index: 0, kind: input, shape index: {}]
  %s1 = inlined_call_operand.hbm [shape: f32[16,2576], index: 1, kind: input, shape index: {}]
  %s2 = inlined_call_operand.vmem [shape: f32[16,1], index: 2, kind: output, shape index: {}]
  %s3 = sld [smem:[#allocation0]]
  $region61: #{tpu_custom_call.1} parent=0
    _
  %s5 = ssub.s32 1, %s3
  %s6 = scalar_select 0, %s5, %s3
  $region1: #{tpu_custom_call.1} parent=0
    #allocation3 [shape = 'u8[10752]{0}', space=vmem, size = 0x2c00, scoped, tag = 'input window, operand 0, single buffered']
    #allocation4 [shape = 's32[2]{0}', space=sflag, size = 0x8, scoped, tag = 'scoped memory for tpu_custom_call.1']
    #allocation5 [shape = 'u8[172032]{0}', space=vmem, size = 0x2a000, scoped, tag = 'input window, operand 1']
    #allocation6 [shape = 's32[2]{0}', space=sflag, size = 0x8, scoped, tag = 'scoped memory for tpu_custom_call.1']
    %7 = vsyncpa [#allocation4], 0
    %8 = vsyncpa [#allocation6], 0
    %s9 = scalar_lea.sflag [#allocation6], 1
    %10 = vsyncpa %s9, 0
    loop: start=0, step=1, limit=4
    $region2: #{tpu_custom_call.1} parent=1 // loop_pre_header
      _
    $region3: #{tpu_custom_call.1} parent=1 // loop_header
      %s12 = sphi 0, %s16
      %p13 = scmp.ge.s32.totalorder %s12, 4
      %s19 = sphi 0, %s31
      %s20 = sphi 0, %s27
      %s21 = sphi 0, %s19
      %s22 = sphi 0, %s20
      %s23 = sphi 0, %s21
      %s24 = sphi 0, %s22
      %s34 = sphi 0, %s36
      %s37 = sphi 0, %s34
      %s38 = sphi 0, %s37
      %s54 = sphi 0, %s38
      %s62 = sphi 0, %s64
      %s65 = sphi 0, %s62
      %s66 = sphi 0, %s65
      %s82 = sphi 0, %s66
      %s88 = sphi 0, %s90
      %s91 = sphi 0, %s88
      %s92 = sphi 0, %s91
      %s108 = sphi 0, %s92
    $region4: #{tpu_custom_call.1} parent=1 // loop_header_branch
      %15 = sbr.rel (%p13) target = $region8
    $region5: #{tpu_custom_call.1} parent=1 // loop_body
      %s17 = ssub.s32 %s12, 1
      %s18 = ssub.s32 %s12, 2
      %s25 = sadd.s32 1, %s20
      %p26 = scmp.ge.s32.totalorder %s25, 1
      %s27 = scalar_select %p26, 0, %s25
      %s28 = sadd.s32 1, %s19
      %s29 = scalar_select %p26, %s28, %s19
      %p30 = scmp.ge.s32.totalorder %s29, 2
      %s31 = scalar_select %p30, 0, %s29
      %s32 = ssub.s32 %s20, %s27
      %p33 = scmp.eq.s32.totalorder %s32, 0
      %s35 = sadd.s32 %s34, 1
      %s36 = scalar_select %p33, %s34, %s35
      %p39 = pneg %p33
      %p40 = scmp.eq.s32.totalorder %s12, 1
      %p41 = por %p39, %p40
      %p42 = scmp.ne.s32.totalorder %s34, %s37
      %p43 = scmp.eq.s32.totalorder %s12, 0
      %p44 = por %p42, %p43
      %p45 = scmp.ne.s32.totalorder %s34, %s37
      %p46 = scmp.eq.s32.totalorder %s17, 1
      %p47 = por %p45, %p46
      %p48 = scmp.ne.s32.totalorder %s37, %s38
      %p49 = scmp.eq.s32.totalorder %s17, 0
      %p50 = por %p48, %p49
      %p51 = scmp.ne.s32.totalorder %s37, %s38
      %p52 = scmp.eq.s32.totalorder %s18, 1
      %p53 = por %p51, %p52
      %p55 = scmp.ne.s32.totalorder %s38, %s54
      %p56 = scmp.eq.s32.totalorder %s18, 0
      %p57 = por %p55, %p56
      %s58 = ssub.s32 %s19, %s31
      %s59 = ssub.s32 %s20, %s27
      %s60 = sor.u32 %s58, %s59
      %p61 = scmp.eq.s32.totalorder %s60, 0
      %s63 = sadd.s32 %s62, 1
      %s64 = scalar_select %p61, %s62, %s63
      %p67 = pneg %p61
      %p68 = scmp.eq.s32.totalorder %s12, 1
      %p69 = por %p67, %p68
      %p70 = scmp.ne.s32.totalorder %s62, %s65
      %p71 = scmp.eq.s32.totalorder %s12, 0
      %p72 = por %p70, %p71
      %p73 = scmp.ne.s32.totalorder %s62, %s65
      %p74 = scmp.eq.s32.totalorder %s17, 1
      %p75 = por %p73, %p74
      %p76 = scmp.ne.s32.totalorder %s65, %s66
      %p77 = scmp.eq.s32.totalorder %s17, 0
      %p78 = por %p76, %p77
      %p79 = scmp.ne.s32.totalorder %s65, %s66
      %p80 = scmp.eq.s32.totalorder %s18, 1
      %p81 = por %p79, %p80
      %p83 = scmp.ne.s32.totalorder %s66, %s82
      %p84 = scmp.eq.s32.totalorder %s18, 0
      %p85 = por %p83, %p84
      %s86 = ssub.s32 %s19, %s31
      %p87 = scmp.eq.s32.totalorder %s86, 0
      %s89 = sadd.s32 %s88, 1
      %s90 = scalar_select %p87, %s88, %s89
      %p93 = pneg %p87
      %p94 = scmp.eq.s32.totalorder %s12, 1
      %p95 = por %p93, %p94
      %p96 = scmp.ne.s32.totalorder %s88, %s91
      %p97 = scmp.eq.s32.totalorder %s12, 0
      %p98 = por %p96, %p97
      %p99 = scmp.ne.s32.totalorder %s88, %s91
      %p100 = scmp.eq.s32.totalorder %s17, 1
      %p101 = por %p99, %p100
      %p102 = scmp.ne.s32.totalorder %s91, %s92
      %p103 = scmp.eq.s32.totalorder %s17, 0
      %p104 = por %p102, %p103
      %p105 = scmp.ne.s32.totalorder %s91, %s92
      %p106 = scmp.eq.s32.totalorder %s18, 1
      %p107 = por %p105, %p106
      %p109 = scmp.ne.s32.totalorder %s92, %s108
      %p110 = scmp.eq.s32.totalorder %s18, 0
      %p111 = por %p109, %p110
      %p112 = scmp.le.s32.totalorder 1, %s12
      %p113 = scmp.lt.s32.totalorder %s12, 3
      %p114 = pnand %p112, %p113
      %p115 = pneg %p114
      // Predicated region
      $region9: #{tpu_custom_call.1} parent=5 // pred_check
        _
      $region10: #{tpu_custom_call.1} parent=5 // pred_check_branch
        %117 = sbr.rel (%p114) target = $region12
      $region11: #{tpu_custom_call.1} parent=5 // pred_region
        %s118 = ssub.s32 %s12, 1
        // Predicated region
        $region13: #{tpu_custom_call.1} parent=11 // pred_check
          %p119 = pneg %p50
        $region14: #{tpu_custom_call.1} parent=11 // pred_check_branch
          %121 = sbr.rel (%p119) target = $region16
        $region15: #{tpu_custom_call.1} parent=11 // pred_region
          %s122 = smul.u32 21, %s22
          %s124 = ssub.s32 336, 336
          %125 = vsyncadd [#allocation4], %s124
          %s126 = smul.addr %s122, 16
          %s127 = scalar_lea.hbm %s0, %s126
          %s129 = sshll.u32 [#allocation3], 4
          %s130 = int_to_ptr.vmem [resolvable:$true] %s129
          %132 = dma.hbm_to_vmem [thread:$0]  %s127, 336, %s130, [#allocation4]
        $region16: #{tpu_custom_call.1} parent=11 // pred_fallthru
          _
      $region12: #{tpu_custom_call.1} parent=5 // pred_fallthru
        _
      %p133 = scmp.lt.s32.totalorder %s12, 2
      // Predicated region
      $region17: #{tpu_custom_call.1} parent=5 // pred_check
        %p134 = pneg %p133
      $region18: #{tpu_custom_call.1} parent=5 // pred_check_branch
        %136 = sbr.rel (%p134) target = $region20
      $region19: #{tpu_custom_call.1} parent=5 // pred_region
        // Predicated region
        $region21: #{tpu_custom_call.1} parent=19 // pred_check
          %p137 = pneg %p72
        $region22: #{tpu_custom_call.1} parent=19 // pred_check_branch
          %139 = sbr.rel (%p137) target = $region24
        $region23: #{tpu_custom_call.1} parent=19 // pred_region
          %s140 = sand.u32 %s62, 1
          %s141 = scalar_lea.sflag [#allocation6], %s140
          %s142 = sand.u32 %s62, 1
          %s143 = smul.addr %s142, 168
          %s144 = scalar_lea.vmem [#allocation5], %s143
          %s145 = smul.u32 21, %s20
          %s147 = ssub.s32 2688, 2688
          %148 = vsyncadd %s141, %s147
          %s149 = smul.addr %s19, 21
          %s150 = sadd.s32 %s145, %s149
          %s151 = smul.addr %s150, 128
          %s152 = scalar_lea.hbm %s1, %s151
          %s154 = sshll.u32 %s144, 4
          %s155 = int_to_ptr.vmem [resolvable:$true] %s154
          %157 = dma.hbm_to_vmem [thread:$0]  %s152, 2688, %s155, %s141
        $region24: #{tpu_custom_call.1} parent=19 // pred_fallthru
          _
      $region20: #{tpu_custom_call.1} parent=5 // pred_fallthru
        _
      %p158 = scmp.le.s32.totalorder 1, %s12
      %p159 = scmp.lt.s32.totalorder %s12, 3
      %p160 = pnand %p158, %p159
      %p161 = pneg %p160
      // Predicated region
      $region25: #{tpu_custom_call.1} parent=5 // pred_check
        _
      $region26: #{tpu_custom_call.1} parent=5 // pred_check_branch
        %163 = sbr.rel (%p160) target = $region28
      $region27: #{tpu_custom_call.1} parent=5 // pred_region
        %s164 = ssub.s32 %s12, 1
        // Predicated region
        $region29: #{tpu_custom_call.1} parent=27 // pred_check
          %p165 = pneg %p50
        $region30: #{tpu_custom_call.1} parent=27 // pred_check_branch
          %167 = sbr.rel (%p165) target = $region32
        $region31: #{tpu_custom_call.1} parent=27 // pred_region
          %168 = dma.done [#allocation4], 336
        $region32: #{tpu_custom_call.1} parent=27 // pred_fallthru
          _
        %s169 = sand.u32 %s65, 1
        %s170 = scalar_lea.sflag [#allocation6], %s169
        %s171 = sand.u32 %s65, 1
        %s172 = smul.addr %s171, 168
        %s173 = scalar_lea.vmem [#allocation5], %s172
        // Predicated region
        $region33: #{tpu_custom_call.1} parent=27 // pred_check
          %p174 = pneg %p78
        $region34: #{tpu_custom_call.1} parent=27 // pred_check_branch
          %176 = sbr.rel (%p174) target = $region36
        $region35: #{tpu_custom_call.1} parent=27 // pred_region
          %177 = dma.done %s170, 2688
        $region36: #{tpu_custom_call.1} parent=27 // pred_fallthru
          _
        %p178 = pneg %p50
        %p179 = pneg %p47
        %s180 = sand.u32 %s65, 1
        %s181 = scalar_lea.sflag [#allocation6], %s180
        %s182 = sand.u32 %s65, 1
        %s183 = smul.addr %s182, 168
        %s184 = scalar_lea.vmem [#allocation5], %s183
        %p185 = pneg %p78
        %p186 = pneg %p75
        %p187 = pneg %p104
        %p188 = pneg %p101
        %p189 = scmp.lt.s32.totalorder %s21, 1
        %s190 = scalar_select %p189, %s21, 1
        %s191 = smul.addr %s190, 8
        %s192 = scalar_lea.vmem %s2, %s191
        %s193 = smul.u32 21, %s22
        %s194 = smul.u32 21, %s22
        %p195 = scmp.lt.s32.totalorder %s21, 1
        %s196 = scalar_select %p195, %s21, 1
        %s197 = smul.addr %s196, 8
        %s198 = scalar_lea.vmem %s2, %s197
        %p199 = scmp.eq.s32.totalorder %s22, 0
        // Predicated region
        $region37: #{tpu_custom_call.1} parent=27 // pred_check
          %p200 = pneg %p199
        $region38: #{tpu_custom_call.1} parent=27 // pred_check_branch
          %202 = sbr.rel (%p200) target = $region40
        $region39: #{tpu_custom_call.1} parent=27 // pred_region
          %203 = vst [vmem:[#allocation2] sm:$0xff] 0.0
          %204 = vst [vmem:[#allocation2 + $0x8] sm:$0xff] 0.0
          %205 = vst [vmem:[#allocation2 + $0x10] sm:$0xff] 0.0
          %206 = vst [vmem:[#allocation2 + $0x18] sm:$0xff] 0.0
          %207 = vst [vmem:[#allocation2 + $0x20] sm:$0xff] 0.0
          %208 = vst [vmem:[#allocation2 + $0x28] sm:$0xff] 0.0
          %209 = vst [vmem:[#allocation2 + $0x30] sm:$0xff] 0.0
          %210 = vst [vmem:[#allocation2 + $0x38] sm:$0xff] 0.0
          %211 = vst [vmem:[#allocation2 + $0x40] sm:$0xff] 0.0
          %212 = vst [vmem:[#allocation2 + $0x48] sm:$0xff] 0.0
          %213 = vst [vmem:[#allocation2 + $0x50] sm:$0xff] 0.0
          %214 = vst [vmem:[#allocation2 + $0x58] sm:$0xff] 0.0
          %215 = vst [vmem:[#allocation2 + $0x60] sm:$0xff] 0.0
          %216 = vst [vmem:[#allocation2 + $0x68] sm:$0xff] 0.0
          %217 = vst [vmem:[#allocation2 + $0x70] sm:$0xff] 0.0
          %218 = vst [vmem:[#allocation2 + $0x78] sm:$0xff] 0.0
          %219 = vst [vmem:[#allocation2 + $0x80] sm:$0xff] 0.0
          %220 = vst [vmem:[#allocation2 + $0x88] sm:$0xff] 0.0
          %221 = vst [vmem:[#allocation2 + $0x90] sm:$0xff] 0.0
          %222 = vst [vmem:[#allocation2 + $0x98] sm:$0xff] 0.0
          %223 = vst [vmem:[#allocation2 + $0xa0] sm:$0xff] 0.0
        $region40: #{tpu_custom_call.1} parent=27 // pred_fallthru
          _
        %v224 = vld [vmem:[#allocation3] sm:$0xff]
        %v225 = vld [vmem:[#allocation3 + $0x8] sm:$0xff]
        %v226 = vld [vmem:[#allocation3 + $0x10] sm:$0x1f]
        %v227 = vld [vmem:[%s173] sm:$0xff]
        %v228 = vld [vmem:[%s173 + $0x8] sm:$0xff]
        %v229 = vld [vmem:[%s173 + $0x10] sm:$0xff]
        %v230 = vld [vmem:[%s173 + $0x18] sm:$0xff]
        %v231 = vld [vmem:[%s173 + $0x20] sm:$0xff]
        %v232 = vld [vmem:[%s173 + $0x28] sm:$0xff]
        %v233 = vld [vmem:[%s173 + $0x30] sm:$0xff]
        %v234 = vld [vmem:[%s173 + $0x38] sm:$0xff]
        %v235 = vld [vmem:[%s173 + $0x40] sm:$0xff]
        %v236 = vld [vmem:[%s173 + $0x48] sm:$0xff]
        %v237 = vld [vmem:[%s173 + $0x50] sm:$0xff]
        %v238 = vld [vmem:[%s173 + $0x58] sm:$0xff]
        %v239 = vld [vmem:[%s173 + $0x60] sm:$0xff]
        %v240 = vld [vmem:[%s173 + $0x68] sm:$0xff]
        %v241 = vld [vmem:[%s173 + $0x70] sm:$0xff]
        %v242 = vld [vmem:[%s173 + $0x78] sm:$0xff]
        %v243 = vld [vmem:[%s173 + $0x80] sm:$0xff]
        %v244 = vld [vmem:[%s173 + $0x88] sm:$0xff]
        %v245 = vld [vmem:[%s173 + $0x90] sm:$0xff]
        %v246 = vld [vmem:[%s173 + $0x98] sm:$0xff]
        %v247 = vld [vmem:[%s173 + $0xa0] sm:$0xff]
        %v251 = vlaneseq
        %v252 = vshrl.u32 %v251, 7
        %v253 = vsub.s32 0, %v252
        %v254 = vrot.slane %v224, %v253
        %v255 = vlaneseq
        %v256 = vshrl.u32 %v255, 7
        %v257 = vsub.s32 1, %v256
        %v258 = vrot.slane %v224, %v257
        %v259 = vlaneseq
        %v260 = vshrl.u32 %v259, 7
        %v261 = vsub.s32 2, %v260
        %v262 = vrot.slane %v224, %v261
        %v263 = vlaneseq
        %v264 = vshrl.u32 %v263, 7
        %v265 = vsub.s32 3, %v264
        %v266 = vrot.slane %v224, %v265
        %v267 = vlaneseq
        %v268 = vshrl.u32 %v267, 7
        %v269 = vsub.s32 4, %v268
        %v270 = vrot.slane %v224, %v269
        %v271 = vlaneseq
        %v272 = vshrl.u32 %v271, 7
        %v273 = vsub.s32 5, %v272
        %v274 = vrot.slane %v224, %v273
        %v275 = vlaneseq
        %v276 = vshrl.u32 %v275, 7
        %v277 = vsub.s32 6, %v276
        %v278 = vrot.slane %v224, %v277
        %v279 = vlaneseq
        %v280 = vshrl.u32 %v279, 7
        %v281 = vsub.s32 7, %v280
        %v282 = vrot.slane %v224, %v281
        %v283 = vlaneseq
        %v284 = vshrl.u32 %v283, 7
        %v285 = vsub.s32 0, %v284
        %v286 = vrot.slane %v225, %v285
        %v287 = vlaneseq
        %v288 = vshrl.u32 %v287, 7
        %v289 = vsub.s32 1, %v288
        %v290 = vrot.slane %v225, %v289
        %v291 = vlaneseq
        %v292 = vshrl.u32 %v291, 7
        %v293 = vsub.s32 2, %v292
        %v294 = vrot.slane %v225, %v293
        %v295 = vlaneseq
        %v296 = vshrl.u32 %v295, 7
        %v297 = vsub.s32 3, %v296
        %v298 = vrot.slane %v225, %v297
        %v299 = vlaneseq
        %v300 = vshrl.u32 %v299, 7
        %v301 = vsub.s32 4, %v300
        %v302 = vrot.slane %v225, %v301
        %v303 = vlaneseq
        %v304 = vshrl.u32 %v303, 7
        %v305 = vsub.s32 5, %v304
        %v306 = vrot.slane %v225, %v305
        %v307 = vlaneseq
        %v308 = vshrl.u32 %v307, 7
        %v309 = vsub.s32 6, %v308
        %v310 = vrot.slane %v225, %v309
        %v311 = vlaneseq
        %v312 = vshrl.u32 %v311, 7
        %v313 = vsub.s32 7, %v312
        %v314 = vrot.slane %v225, %v313
        %v315 = vlaneseq
        %v316 = vshrl.u32 %v315, 7
        %v317 = vsub.s32 0, %v316
        %v318 = vrot.slane %v226, %v317
        %v319 = vlaneseq
        %v320 = vshrl.u32 %v319, 7
        %v321 = vsub.s32 1, %v320
        %v322 = vrot.slane %v226, %v321
        %v323 = vlaneseq
        %v324 = vshrl.u32 %v323, 7
        %v325 = vsub.s32 2, %v324
        %v326 = vrot.slane %v226, %v325
        %v327 = vlaneseq
        %v328 = vshrl.u32 %v327, 7
        %v329 = vsub.s32 3, %v328
        %v330 = vrot.slane %v226, %v329
        %v331 = vlaneseq
        %v332 = vshrl.u32 %v331, 7
        %v333 = vsub.s32 4, %v332
        %v334 = vrot.slane %v226, %v333
        %v356 = vmul.f32 %v254, %v227
        %v357 = vmul.f32 %v258, %v228
        %v358 = vmul.f32 %v262, %v229
        %v359 = vmul.f32 %v266, %v230
        %v360 = vmul.f32 %v270, %v231
        %v361 = vmul.f32 %v274, %v232
        %v362 = vmul.f32 %v278, %v233
        %v363 = vmul.f32 %v282, %v234
        %v364 = vmul.f32 %v286, %v235
        %v365 = vmul.f32 %v290, %v236
        %v366 = vmul.f32 %v294, %v237
        %v367 = vmul.f32 %v298, %v238
        %v368 = vmul.f32 %v302, %v239
        %v369 = vmul.f32 %v306, %v240
        %v370 = vmul.f32 %v310, %v241
        %v371 = vmul.f32 %v314, %v242
        %v372 = vmul.f32 %v318, %v243
        %v373 = vmul.f32 %v322, %v244
        %v374 = vmul.f32 %v326, %v245
        %v375 = vmul.f32 %v330, %v246
        %v376 = vmul.f32 %v334, %v247
        %p377 = scmp.ne.s32.totalorder %s22, 0
        // Predicated region
        $region41: #{tpu_custom_call.1} parent=27 // pred_check
          %p378 = pneg %p377
        $region42: #{tpu_custom_call.1} parent=27 // pred_check_branch
          %380 = sbr.rel (%p378) target = $region44
        $region43: #{tpu_custom_call.1} parent=27 // pred_region
          %v381 = vld [vmem:[#allocation2] sm:$0xff]
          %v382 = vld [vmem:[#allocation2 + $0x8] sm:$0xff]
          %v383 = vld [vmem:[#allocation2 + $0x10] sm:$0xff]
          %v384 = vld [vmem:[#allocation2 + $0x18] sm:$0xff]
          %v385 = vld [vmem:[#allocation2 + $0x20] sm:$0xff]
          %v386 = vld [vmem:[#allocation2 + $0x28] sm:$0xff]
          %v387 = vld [vmem:[#allocation2 + $0x30] sm:$0xff]
          %v388 = vld [vmem:[#allocation2 + $0x38] sm:$0xff]
          %v389 = vld [vmem:[#allocation2 + $0x40] sm:$0xff]
          %v390 = vld [vmem:[#allocation2 + $0x48] sm:$0xff]
          %v391 = vld [vmem:[#allocation2 + $0x50] sm:$0xff]
          %v392 = vld [vmem:[#allocation2 + $0x58] sm:$0xff]
          %v393 = vld [vmem:[#allocation2 + $0x60] sm:$0xff]
          %v394 = vld [vmem:[#allocation2 + $0x68] sm:$0xff]
          %v395 = vld [vmem:[#allocation2 + $0x70] sm:$0xff]
          %v396 = vld [vmem:[#allocation2 + $0x78] sm:$0xff]
          %v397 = vld [vmem:[#allocation2 + $0x80] sm:$0xff]
          %v398 = vld [vmem:[#allocation2 + $0x88] sm:$0xff]
          %v399 = vld [vmem:[#allocation2 + $0x90] sm:$0xff]
          %v400 = vld [vmem:[#allocation2 + $0x98] sm:$0xff]
          %v401 = vld [vmem:[#allocation2 + $0xa0] sm:$0xff]
          %v402 = vadd.f32 %v381, %v356
          %v403 = vadd.f32 %v382, %v357
          %v404 = vadd.f32 %v383, %v358
          %v405 = vadd.f32 %v384, %v359
          %v406 = vadd.f32 %v385, %v360
          %v407 = vadd.f32 %v386, %v361
          %v408 = vadd.f32 %v387, %v362
          %v409 = vadd.f32 %v388, %v363
          %v410 = vadd.f32 %v389, %v364
          %v411 = vadd.f32 %v390, %v365
          %v412 = vadd.f32 %v391, %v366
          %v413 = vadd.f32 %v392, %v367
          %v414 = vadd.f32 %v393, %v368
          %v415 = vadd.f32 %v394, %v369
          %v416 = vadd.f32 %v395, %v370
          %v417 = vadd.f32 %v396, %v371
          %v418 = vadd.f32 %v397, %v372
          %v419 = vadd.f32 %v398, %v373
          %v420 = vadd.f32 %v399, %v374
          %v421 = vadd.f32 %v400, %v375
          %v422 = vadd.f32 %v401, %v376
          %423 = vst [vmem:[#allocation2] sm:$0xff] %v402
          %424 = vst [vmem:[#allocation2 + $0x8] sm:$0xff] %v403
          %425 = vst [vmem:[#allocation2 + $0x10] sm:$0xff] %v404
          %426 = vst [vmem:[#allocation2 + $0x18] sm:$0xff] %v405
          %427 = vst [vmem:[#allocation2 + $0x20] sm:$0xff] %v406
          %428 = vst [vmem:[#allocation2 + $0x28] sm:$0xff] %v407
          %429 = vst [vmem:[#allocation2 + $0x30] sm:$0xff] %v408
          %430 = vst [vmem:[#allocation2 + $0x38] sm:$0xff] %v409
          %431 = vst [vmem:[#allocation2 + $0x40] sm:$0xff] %v410
          %432 = vst [vmem:[#allocation2 + $0x48] sm:$0xff] %v411
          %433 = vst [vmem:[#allocation2 + $0x50] sm:$0xff] %v412
          %434 = vst [vmem:[#allocation2 + $0x58] sm:$0xff] %v413
          %435 = vst [vmem:[#allocation2 + $0x60] sm:$0xff] %v414
          %436 = vst [vmem:[#allocation2 + $0x68] sm:$0xff] %v415
          %437 = vst [vmem:[#allocation2 + $0x70] sm:$0xff] %v416
          %438 = vst [vmem:[#allocation2 + $0x78] sm:$0xff] %v417
          %439 = vst [vmem:[#allocation2 + $0x80] sm:$0xff] %v418
          %440 = vst [vmem:[#allocation2 + $0x88] sm:$0xff] %v419
          %441 = vst [vmem:[#allocation2 + $0x90] sm:$0xff] %v420
          %442 = vst [vmem:[#allocation2 + $0x98] sm:$0xff] %v421
          %443 = vst [vmem:[#allocation2 + $0xa0] sm:$0xff] %v422
        $region44: #{tpu_custom_call.1} parent=27 // pred_fallthru
          _
        // Predicated region
        $region45: #{tpu_custom_call.1} parent=27 // pred_check
          %p444 = pneg %p199
        $region46: #{tpu_custom_call.1} parent=27 // pred_check_branch
          %446 = sbr.rel (%p444) target = $region48
        $region47: #{tpu_custom_call.1} parent=27 // pred_region
          %v447 = vlaneseq
          %v448 = vand.u32 %v447, 127
          %v449 = vadd.s32 %v448, 128
          %v450 = vadd.s32 %v448, 256
          %v451 = vadd.s32 %v448, 384
          %v452 = vadd.s32 %v448, 512
          %v453 = vadd.s32 %v448, 640
          %v454 = vadd.s32 %v448, 768
          %v455 = vadd.s32 %v448, 896
          %v456 = vadd.s32 %v448, 1024
          %v457 = vadd.s32 %v448, 1152
          %v458 = vadd.s32 %v448, 1280
          %v459 = vadd.s32 %v448, 1408
          %v460 = vadd.s32 %v448, 1536
          %v461 = vadd.s32 %v448, 1664
          %v462 = vadd.s32 %v448, 1792
          %v463 = vadd.s32 %v448, 1920
          %v464 = vadd.s32 %v448, 2048
          %v465 = vadd.s32 %v448, 2176
          %v466 = vadd.s32 %v448, 2304
          %v467 = vadd.s32 %v448, 2432
          %v468 = vadd.s32 %v448, 2560
          %s469 = smul.u32 %s22, 2688
          %v470 = vstv %s469
          %v471 = vadd.s32 %v470, %v448
          %v472 = vadd.s32 %v470, %v449
          %v473 = vadd.s32 %v470, %v450
          %v474 = vadd.s32 %v470, %v451
          %v475 = vadd.s32 %v470, %v452
          %v476 = vadd.s32 %v470, %v453
          %v477 = vadd.s32 %v470, %v454
          %v478 = vadd.s32 %v470, %v455
          %v479 = vadd.s32 %v470, %v456
          %v480 = vadd.s32 %v470, %v457
          %v481 = vadd.s32 %v470, %v458
          %v482 = vadd.s32 %v470, %v459
          %v483 = vadd.s32 %v470, %v460
          %v484 = vadd.s32 %v470, %v461
          %v485 = vadd.s32 %v470, %v462
          %v486 = vadd.s32 %v470, %v463
          %v487 = vadd.s32 %v470, %v464
          %v488 = vadd.s32 %v470, %v465
          %v489 = vadd.s32 %v470, %v466
          %v490 = vadd.s32 %v470, %v467
          %v491 = vadd.s32 %v470, %v468
          %vm492 = vcmp.lt.s32.totalorder %v471, 2576
          %vm493 = vcmp.lt.s32.totalorder %v472, 2576
          %vm494 = vcmp.lt.s32.totalorder %v473, 2576
          %vm495 = vcmp.lt.s32.totalorder %v474, 2576
          %vm496 = vcmp.lt.s32.totalorder %v475, 2576
          %vm497 = vcmp.lt.s32.totalorder %v476, 2576
          %vm498 = vcmp.lt.s32.totalorder %v477, 2576
          %vm499 = vcmp.lt.s32.totalorder %v478, 2576
          %vm500 = vcmp.lt.s32.totalorder %v479, 2576
          %vm501 = vcmp.lt.s32.totalorder %v480, 2576
          %vm502 = vcmp.lt.s32.totalorder %v481, 2576
          %vm503 = vcmp.lt.s32.totalorder %v482, 2576
          %vm504 = vcmp.lt.s32.totalorder %v483, 2576
          %vm505 = vcmp.lt.s32.totalorder %v484, 2576
          %vm506 = vcmp.lt.s32.totalorder %v485, 2576
          %vm507 = vcmp.lt.s32.totalorder %v486, 2576
          %vm508 = vcmp.lt.s32.totalorder %v487, 2576
          %vm509 = vcmp.lt.s32.totalorder %v488, 2576
          %vm510 = vcmp.lt.s32.totalorder %v489, 2576
          %vm511 = vcmp.lt.s32.totalorder %v490, 2576
          %vm512 = vcmp.lt.s32.totalorder %v491, 2576
          %v513 = vld [vmem:[#allocation2] sm:$0xff]
          %v514 = vld [vmem:[#allocation2 + $0x8] sm:$0xff]
          %v515 = vld [vmem:[#allocation2 + $0x10] sm:$0xff]
          %v516 = vld [vmem:[#allocation2 + $0x18] sm:$0xff]
          %v517 = vld [vmem:[#allocation2 + $0x20] sm:$0xff]
          %v518 = vld [vmem:[#allocation2 + $0x28] sm:$0xff]
          %v519 = vld [vmem:[#allocation2 + $0x30] sm:$0xff]
          %v520 = vld [vmem:[#allocation2 + $0x38] sm:$0xff]
          %v521 = vld [vmem:[#allocation2 + $0x40] sm:$0xff]
          %v522 = vld [vmem:[#allocation2 + $0x48] sm:$0xff]
          %v523 = vld [vmem:[#allocation2 + $0x50] sm:$0xff]
          %v524 = vld [vmem:[#allocation2 + $0x58] sm:$0xff]
          %v525 = vld [vmem:[#allocation2 + $0x60] sm:$0xff]
          %v526 = vld [vmem:[#allocation2 + $0x68] sm:$0xff]
          %v527 = vld [vmem:[#allocation2 + $0x70] sm:$0xff]
          %v528 = vld [vmem:[#allocation2 + $0x78] sm:$0xff]
          %v529 = vld [vmem:[#allocation2 + $0x80] sm:$0xff]
          %v530 = vld [vmem:[#allocation2 + $0x88] sm:$0xff]
          %v531 = vld [vmem:[#allocation2 + $0x90] sm:$0xff]
          %v532 = vld [vmem:[#allocation2 + $0x98] sm:$0xff]
          %v533 = vld [vmem:[#allocation2 + $0xa0] sm:$0xff]
          %v534 = vsel %vm492, 1, 0
          %v535 = vsel %vm493, 1, 0
          %v536 = vsel %vm494, 1, 0
          %v537 = vsel %vm495, 1, 0
          %v538 = vsel %vm496, 1, 0
          %v539 = vsel %vm497, 1, 0
          %v540 = vsel %vm498, 1, 0
          %v541 = vsel %vm499, 1, 0
          %v542 = vsel %vm500, 1, 0
          %v543 = vsel %vm501, 1, 0
          %v544 = vsel %vm502, 1, 0
          %v545 = vsel %vm503, 1, 0
          %v546 = vsel %vm504, 1, 0
          %v547 = vsel %vm505, 1, 0
          %v548 = vsel %vm506, 1, 0
          %v549 = vsel %vm507, 1, 0
          %v550 = vsel %vm508, 1, 0
          %v551 = vsel %vm509, 1, 0
          %v552 = vsel %vm510, 1, 0
          %v553 = vsel %vm511, 1, 0
          %v554 = vsel %vm512, 1, 0
          %vm555 = vcmp.eq.s32.totalorder %v534, 1
          %vm556 = vcmp.eq.s32.totalorder %v535, 1
          %vm557 = vcmp.eq.s32.totalorder %v536, 1
          %vm558 = vcmp.eq.s32.totalorder %v537, 1
          %vm559 = vcmp.eq.s32.totalorder %v538, 1
          %vm560 = vcmp.eq.s32.totalorder %v539, 1
          %vm561 = vcmp.eq.s32.totalorder %v540, 1
          %vm562 = vcmp.eq.s32.totalorder %v541, 1
          %vm563 = vcmp.eq.s32.totalorder %v542, 1
          %vm564 = vcmp.eq.s32.totalorder %v543, 1
          %vm565 = vcmp.eq.s32.totalorder %v544, 1
          %vm566 = vcmp.eq.s32.totalorder %v545, 1
          %vm567 = vcmp.eq.s32.totalorder %v546, 1
          %vm568 = vcmp.eq.s32.totalorder %v547, 1
          %vm569 = vcmp.eq.s32.totalorder %v548, 1
          %vm570 = vcmp.eq.s32.totalorder %v549, 1
          %vm571 = vcmp.eq.s32.totalorder %v550, 1
          %vm572 = vcmp.eq.s32.totalorder %v551, 1
          %vm573 = vcmp.eq.s32.totalorder %v552, 1
          %vm574 = vcmp.eq.s32.totalorder %v553, 1
          %vm575 = vcmp.eq.s32.totalorder %v554, 1
          %v576 = vsel %vm555, %v356, 0.0
          %v577 = vsel %vm556, %v357, 0.0
          %v578 = vsel %vm557, %v358, 0.0
          %v579 = vsel %vm558, %v359, 0.0
          %v580 = vsel %vm559, %v360, 0.0
          %v581 = vsel %vm560, %v361, 0.0
          %v582 = vsel %vm561, %v362, 0.0
          %v583 = vsel %vm562, %v363, 0.0
          %v584 = vsel %vm563, %v364, 0.0
          %v585 = vsel %vm564, %v365, 0.0
          %v586 = vsel %vm565, %v366, 0.0
          %v587 = vsel %vm566, %v367, 0.0
          %v588 = vsel %vm567, %v368, 0.0
          %v589 = vsel %vm568, %v369, 0.0
          %v590 = vsel %vm569, %v370, 0.0
          %v591 = vsel %vm570, %v371, 0.0
          %v592 = vsel %vm571, %v372, 0.0
          %v593 = vsel %vm572, %v373, 0.0
          %v594 = vsel %vm573, %v374, 0.0
          %v595 = vsel %vm574, %v375, 0.0
          %v596 = vsel %vm575, %v376, 0.0
          %v597 = vadd.f32 %v513, %v576
          %v598 = vadd.f32 %v514, %v577
          %v599 = vadd.f32 %v515, %v578
          %v600 = vadd.f32 %v516, %v579
          %v601 = vadd.f32 %v517, %v580
          %v602 = vadd.f32 %v518, %v581
          %v603 = vadd.f32 %v519, %v582
          %v604 = vadd.f32 %v520, %v583
          %v605 = vadd.f32 %v521, %v584
          %v606 = vadd.f32 %v522, %v585
          %v607 = vadd.f32 %v523, %v586
          %v608 = vadd.f32 %v524, %v587
          %v609 = vadd.f32 %v525, %v588
          %v610 = vadd.f32 %v526, %v589
          %v611 = vadd.f32 %v527, %v590
          %v612 = vadd.f32 %v528, %v591
          %v613 = vadd.f32 %v529, %v592
          %v614 = vadd.f32 %v530, %v593
          %v615 = vadd.f32 %v531, %v594
          %v616 = vadd.f32 %v532, %v595
          %v617 = vadd.f32 %v533, %v596
          %618 = vst [vmem:[#allocation2] sm:$0xff] %v597
          %619 = vst [vmem:[#allocation2 + $0x8] sm:$0xff] %v598
          %620 = vst [vmem:[#allocation2 + $0x10] sm:$0xff] %v599
          %621 = vst [vmem:[#allocation2 + $0x18] sm:$0xff] %v600
          %622 = vst [vmem:[#allocation2 + $0x20] sm:$0xff] %v601
          %623 = vst [vmem:[#allocation2 + $0x28] sm:$0xff] %v602
          %624 = vst [vmem:[#allocation2 + $0x30] sm:$0xff] %v603
          %625 = vst [vmem:[#allocation2 + $0x38] sm:$0xff] %v604
          %626 = vst [vmem:[#allocation2 + $0x40] sm:$0xff] %v605
          %627 = vst [vmem:[#allocation2 + $0x48] sm:$0xff] %v606
          %628 = vst [vmem:[#allocation2 + $0x50] sm:$0xff] %v607
          %629 = vst [vmem:[#allocation2 + $0x58] sm:$0xff] %v608
          %630 = vst [vmem:[#allocation2 + $0x60] sm:$0xff] %v609
          %631 = vst [vmem:[#allocation2 + $0x68] sm:$0xff] %v610
          %632 = vst [vmem:[#allocation2 + $0x70] sm:$0xff] %v611
          %633 = vst [vmem:[#allocation2 + $0x78] sm:$0xff] %v612
          %634 = vst [vmem:[#allocation2 + $0x80] sm:$0xff] %v613
          %635 = vst [vmem:[#allocation2 + $0x88] sm:$0xff] %v614
          %636 = vst [vmem:[#allocation2 + $0x90] sm:$0xff] %v615
          %637 = vst [vmem:[#allocation2 + $0x98] sm:$0xff] %v616
          %638 = vst [vmem:[#allocation2 + $0xa0] sm:$0xff] %v617
          %v639 = vld [vmem:[#allocation2] sm:$0xff]
          %v640 = vld [vmem:[#allocation2 + $0x8] sm:$0xff]
          %v641 = vld [vmem:[#allocation2 + $0x10] sm:$0xff]
          %v642 = vld [vmem:[#allocation2 + $0x18] sm:$0xff]
          %v643 = vld [vmem:[#allocation2 + $0x20] sm:$0xff]
          %v644 = vld [vmem:[#allocation2 + $0x28] sm:$0xff]
          %v645 = vld [vmem:[#allocation2 + $0x30] sm:$0xff]
          %v646 = vld [vmem:[#allocation2 + $0x38] sm:$0xff]
          %v647 = vld [vmem:[#allocation2 + $0x40] sm:$0xff]
          %v648 = vld [vmem:[#allocation2 + $0x48] sm:$0xff]
          %v649 = vld [vmem:[#allocation2 + $0x50] sm:$0xff]
          %v650 = vld [vmem:[#allocation2 + $0x58] sm:$0xff]
          %v651 = vld [vmem:[#allocation2 + $0x60] sm:$0xff]
          %v652 = vld [vmem:[#allocation2 + $0x68] sm:$0xff]
          %v653 = vld [vmem:[#allocation2 + $0x70] sm:$0xff]
          %v654 = vld [vmem:[#allocation2 + $0x78] sm:$0xff]
          %v655 = vld [vmem:[#allocation2 + $0x80] sm:$0xff]
          %v656 = vld [vmem:[#allocation2 + $0x88] sm:$0xff]
          %v657 = vld [vmem:[#allocation2 + $0x90] sm:$0xff]
          %v658 = vld [vmem:[#allocation2 + $0x98] sm:$0xff]
          %v659 = vld [vmem:[#allocation2 + $0xa0] sm:$0xff]
          %v660 = vadd.f32 %v639, %v640
          %v661 = vadd.f32 %v660, %v641
          %v662 = vadd.f32 %v661, %v642
          %v663 = vadd.f32 %v662, %v643
          %v664 = vadd.f32 %v663, %v644
          %v665 = vadd.f32 %v664, %v645
          %v666 = vadd.f32 %v665, %v646
          %v667 = vadd.f32 %v666, %v647
          %v668 = vadd.f32 %v667, %v648
          %v669 = vadd.f32 %v668, %v649
          %v670 = vadd.f32 %v669, %v650
          %v671 = vadd.f32 %v670, %v651
          %v672 = vadd.f32 %v671, %v652
          %v673 = vadd.f32 %v672, %v653
          %v674 = vadd.f32 %v673, %v654
          %v675 = vadd.f32 %v674, %v655
          %v676 = vadd.f32 %v675, %v656
          %v677 = vadd.f32 %v676, %v657
          %v678 = vadd.f32 %v677, %v658
          %v679 = vadd.f32 %v678, %v659
          %680 = vadd.xlane.f32.xlu0 %v679
          %v681 = vpop.xlane.xlu0 %680
          %vm682 = vcmask 7168
          %683 = vst.msk [vmem:[%s198] sm:$0xff] %vm682, %v681
        $region48: #{tpu_custom_call.1} parent=27 // pred_fallthru
          _
        %p684 = scmp.lt.s32.totalorder %s21, 1
        %s685 = scalar_select %p684, %s21, 1
        %s686 = smul.addr %s685, 8
        %s687 = scalar_lea.vmem %s2, %s686
        // Predicated region
        $region49: #{tpu_custom_call.1} parent=27 // pred_check
          %p688 = pneg %p101
        $region50: #{tpu_custom_call.1} parent=27 // pred_check_branch
          %690 = sbr.rel (%p688) target = $region52
        $region51: #{tpu_custom_call.1} parent=27 // pred_region
          _
        $region52: #{tpu_custom_call.1} parent=27 // pred_fallthru
          _
      $region28: #{tpu_custom_call.1} parent=5 // pred_fallthru
        _
      %p691 = scmp.le.s32.totalorder 2, %s12
      // Predicated region
      $region53: #{tpu_custom_call.1} parent=5 // pred_check
        %p692 = pneg %p691
      $region54: #{tpu_custom_call.1} parent=5 // pred_check_branch
        %694 = sbr.rel (%p692) target = $region56
      $region55: #{tpu_custom_call.1} parent=5 // pred_region
        %s695 = ssub.s32 %s12, 2
        // Predicated region
        $region57: #{tpu_custom_call.1} parent=55 // pred_check
          %p696 = pneg %p107
        $region58: #{tpu_custom_call.1} parent=55 // pred_check_branch
          %698 = sbr.rel (%p696) target = $region60
        $region59: #{tpu_custom_call.1} parent=55 // pred_region
          %p699 = scmp.lt.s32.totalorder %s23, 1
          %s700 = scalar_select %p699, %s23, 1
          %s701 = smul.addr %s700, 8
          %s702 = scalar_lea.vmem %s2, %s701
        $region60: #{tpu_custom_call.1} parent=55 // pred_fallthru
          _
      $region56: #{tpu_custom_call.1} parent=5 // pred_fallthru
        _
    $region6: #{tpu_custom_call.1} parent=1 // loop_footer
      %s16 = sadd.s32 1, %s12
    $region7: #{tpu_custom_call.1} parent=1 // loop_footer_branch
      %11 = sbr.rel target = $region3
    $region8: #{tpu_custom_call.1} parent=1 // loop_exit
      _
    %703 = vsyncpa [#allocation4], 1
    %s704 = scalar_lea.sflag [#allocation4], 1
    %705 = vsyncpa %s704, 1
    %706 = vsyncpa [#allocation6], 1
    %s707 = scalar_lea.sflag [#allocation6], 1
    %708 = vsyncpa %s707, 1

</llo_original>
